<compile_context>
chip_gen: v5e
topology: v5e:2x2
jax: 0.10.0
libtpu: 0.0.40
codegen_flags: <defaults>
</compile_context>

<pallas_src>
import jax
import jax.numpy as jnp
from jax.experimental import pallas as pl
from jax.experimental.pallas import tpu as pltpu


def _scale_shift_kernel(w_ref, b_ref, x_ref, o_ref):
    # w_ref, b_ref: (1,) f32 scalar-prefetch refs in SMEM.
    # x_ref / o_ref: (tile_rows, lanes) VMEM tiles.
    w = w_ref[0]
    b = b_ref[0]
    x = x_ref[...].astype(jnp.float32)   # identity for f32 inputs
    o_ref[...] = (x * w + b).astype(o_ref.dtype)


def _pick_lanes(n, max_lanes):
    """Largest multiple of 128 (<= max_lanes) dividing n, else 128."""
    lanes = max_lanes
    while lanes > 128 and n % lanes != 0:
        lanes -= 128
    return lanes


def lr_model_forward(x, weight, bias, *, max_lanes=1024, tile_bytes=4 << 20,
                     tile_rows=None, min_pallas_elems=1 << 20,
                     vmem_limit_bytes=None):
    """Linear(1, 1) forward.  x: [..., 1] (typically [N, 1]); weight: [1, 1]; bias: [1]."""
    orig_shape = x.shape
    n = x.size
    out_dtype = x.dtype

    w = weight.reshape(()).astype(jnp.float32)
    b = bias.reshape(()).astype(jnp.float32)

    if n == 0:
        return x

    # Tiny inputs: XLA's fused elementwise kernel is already at HBM roofline.
    if n < min_pallas_elems:
        return (x.astype(jnp.float32) * w + b).astype(out_dtype).reshape(orig_shape)

    assert max_lanes % 128 == 0
    itemsize = jnp.dtype(out_dtype).itemsize
    sublane_min = {4: 8, 2: 16, 1: 32}.get(itemsize, 8)   # dtype-aware min row tile

    lanes = _pick_lanes(n, max_lanes)
    x_flat = x.reshape(-1)
    rows = n // lanes
    n_main = rows * lanes          # lanes-aligned prefix handled by the Pallas kernel

    if rows == 0:                  # (only reachable with a tiny min_pallas_elems)
        return (x.astype(jnp.float32) * w + b).astype(out_dtype).reshape(orig_shape)

    # Tile rows: target ~tile_bytes per tile, rounded down to the sublane minimum.
    if tile_rows is None:
        tile_rows = max(sublane_min,
                        (tile_bytes // (lanes * itemsize)) // sublane_min * sublane_min)
    if rows <= tile_rows:
        tr = rows                  # single block == full array dim (always a legal block)
    else:
        tr = max(sublane_min, (tile_rows // sublane_min) * sublane_min)
    grid = (pl.cdiv(rows, tr),)    # ragged last row-block is masked by Pallas

    # Explicit VMEM budget: 2 arrays x 2 buffers x tile + headroom for internal
    # scratch.  Clears v5e's 16 MiB scoped default, stays under v7x's 64 MiB.
    if vmem_limit_bytes is None:
        tile_b = tr * lanes * itemsize
        vmem_limit_bytes = max(16 << 20, min(4 * tile_b + (8 << 20), 48 << 20))

    x_main = x_flat if n_main == n else x_flat[:n_main]
    x2d = x_main.reshape(rows, lanes)   # free reshape: contiguous, no padding

    out2d = pl.pallas_call(
        _scale_shift_kernel,
        out_shape=jax.ShapeDtypeStruct((rows, lanes), out_dtype),
        grid_spec=pltpu.PrefetchScalarGridSpec(
            num_scalar_prefetch=2,                        # weight, bias -> SMEM up front
            grid=grid,
            in_specs=[
                pl.BlockSpec((tr, lanes), lambda i, w_s, b_s: (i, 0)),   # x tile stream
            ],
            out_specs=pl.BlockSpec((tr, lanes), lambda i, w_s, b_s: (i, 0)),
        ),
        compiler_params=pltpu.CompilerParams(
            dimension_semantics=("parallel",),   # shard row axis across TCs on v7x
            vmem_limit_bytes=vmem_limit_bytes,
        ),
        cost_estimate=pl.CostEstimate(
            flops=2 * n_main,
            transcendentals=0,
            bytes_accessed=2 * n_main * itemsize,
        ),
    )(w.reshape(1), b.reshape(1), x2d)

    out_main = out2d.reshape(-1)
    if n_main == n:
        return out_main.reshape(orig_shape)

    # Sub-128-element flat tail: compute with XLA, stitch on (single small concat;
    # only taken when N is not a multiple of 128).
    tail = x_flat[n_main:]
    tail_out = (tail.astype(jnp.float32) * w + b).astype(out_dtype)
    return jnp.concatenate([out_main, tail_out]).reshape(orig_shape)


if __name__ == "__main__":
    key = jax.random.PRNGKey(0)
    kx, kw, kb = jax.random.split(key, 3)

    # Deterministic parameters (PyTorch-style uniform in [-1, 1] for fan_in=1).
    weight = jax.random.uniform(kw, (1, 1), minval=-1.0, maxval=1.0, dtype=jnp.float32)
    bias = jax.random.uniform(kb, (1,), minval=-1.0, maxval=1.0, dtype=jnp.float32)

    # 1) Aligned, single-block Pallas path (8192 x 1 f32 = 32 KiB).
    #    min_pallas_elems=0 forces the kernel path at this small demo size.
    N = 8192
    x = jax.random.normal(kx, (N, 1), dtype=jnp.float32)
    y = jax.block_until_ready(lr_model_forward(x, weight, bias, min_pallas_elems=0))
    y_ref = x @ weight.T + bias
    assert y.shape == (N, 1) and y.dtype == x.dtype
    assert jnp.allclose(y, y_ref, atol=1e-6), "mismatch vs reference (single block)"

    # 2) Multi-block grid with a ragged last row-block (Pallas masks it; no padding).
    N2 = 65536          # lanes=1024 -> 64 rows; tile_rows=24 -> grid=(3,), last block partial
    x2 = jax.random.normal(kx, (N2, 1), dtype=jnp.float32)
    y2 = jax.block_until_ready(
        lr_model_forward(x2, weight, bias, min_pallas_elems=0, tile_rows=24))
    assert jnp.allclose(y2, x2 @ weight.T + bias, atol=1e-6), "mismatch vs reference (tiled)"

    # 3) N not a multiple of 128: lanes-aligned prefix via Pallas, tiny tail via XLA.
    N3 = 5000
    x3 = jax.random.normal(kx, (N3, 1), dtype=jnp.float32)
    y3 = jax.block_until_ready(lr_model_forward(x3, weight, bias, min_pallas_elems=0))
    assert y3.shape == (N3, 1)
    assert jnp.allclose(y3, x3 @ weight.T + bias, atol=1e-6), "mismatch vs reference (ragged)"

    # 4) Tiny-N fallback (pure XLA fusion, no Pallas launch at the default 1M threshold).
    x4 = jax.random.normal(kb, (8, 1), dtype=jnp.float32)
    y4 = jax.block_until_ready(lr_model_forward(x4, weight, bias))
    assert jnp.allclose(y4, x4 @ weight.T + bias, atol=1e-6), "mismatch vs reference (tiny)"

    print("KERNEL_OK")
</pallas_src>

<mosaic_0001>
module attributes {stable_mosaic.version = 11 : i64} {
  func.func @_scale_shift_kernel(%arg0: i32, %arg1: memref<1xf32, #tpu.memory_space<smem>>, %arg2: memref<1xf32, #tpu.memory_space<smem>>, %arg3: memref<8x1024xf32, #tpu.memory_space<vmem>>, %arg4: memref<8x1024xf32, #tpu.memory_space<vmem>>) attributes {dimension_semantics = [#tpu.dimension_semantics<parallel>], iteration_bounds = array<i64: 1>, scalar_prefetch = 2 : i64, scratch_operands = 0 : i64, tpu.core_type = #tpu.core_type<tc>, window_params = [{transform_indices = @transform_0, window_bounds = array<i64: 8, 1024>}, {transform_indices = @transform_1, window_bounds = array<i64: 8, 1024>}]} {
    %c0 = arith.constant 0 : index
    %0 = memref.load %arg1[%c0] : memref<1xf32, #tpu.memory_space<smem>>
    %c0_0 = arith.constant 0 : index
    %1 = memref.load %arg2[%c0_0] : memref<1xf32, #tpu.memory_space<smem>>
    %c0_1 = arith.constant 0 : index
    %c0_2 = arith.constant 0 : index
    %2 = vector.load %arg3[%c0_1, %c0_2] : memref<8x1024xf32, #tpu.memory_space<vmem>>, vector<8x1024xf32>
    %3 = vector.broadcast %0 : f32 to vector<8x1024xf32>
    %4 = arith.mulf %2, %3 : vector<8x1024xf32>
    %5 = vector.broadcast %1 : f32 to vector<8x1024xf32>
    %6 = arith.addf %4, %5 : vector<8x1024xf32>
    %c0_3 = arith.constant 0 : index
    %c0_4 = arith.constant 0 : index
    %7 = vector.load %arg4[%c0_3, %c0_4] : memref<8x1024xf32, #tpu.memory_space<vmem>>, vector<8x1024xf32>
    tpu.vector_store %arg4[%c0_3, %c0_4], %6 {strides = array<i32>} : memref<8x1024xf32, #tpu.memory_space<vmem>>, vector<8x1024xf32>,
    return
  }
  func.func @transform_0(%arg0: i32, %arg1: memref<1xf32, #tpu.memory_space<smem>>, %arg2: memref<1xf32, #tpu.memory_space<smem>>) -> (i32, i32) {
    %c0_i32 = arith.constant 0 : i32
    %c0_i32_0 = arith.constant 0 : i32
    return %arg0, %c0_i32 : i32, i32
  }
  func.func @transform_1(%arg0: i32, %arg1: memref<1xf32, #tpu.memory_space<smem>>, %arg2: memref<1xf32, #tpu.memory_space<smem>>) -> (i32, i32) {
    %c0_i32 = arith.constant 0 : i32
    %c0_i32_0 = arith.constant 0 : i32
    return %arg0, %c0_i32 : i32, i32
  }
}

</mosaic_0001>

<llo_original>
// kernel: tpu_custom_call.1
$region0: #{tpu_custom_call.1}
  #allocation0 [shape = 'u32[]', space=smem, size = 0x4, offset = 0x4, fixed_abs, tag = 'smem constant byte address 0x4 - core index']
  #allocation1 [shape = 'u32[72,128]{1,0:T(1,128)}', space=vmem, size = 0x9000, scoped, tag = 'internal scratch']
  #allocation2 [shape = 's32[1]{0}', space=sflag, size = 0x4, scoped, tag = 'scoped memory for tpu_custom_call.1']
  #allocation3 [shape = 'f32[1]{0:T(128)S(6)}', space=smem, size = 0x200, scoped, tag = 'prefetched SMEM operand 0']
  #allocation4 [shape = 'f32[1]{0:T(128)S(6)}', space=smem, size = 0x200, scoped, tag = 'prefetched SMEM operand 1']
  %s0 = inlined_call_operand.<no memory space> [shape: f32[1], index: 0, kind: input, shape index: {}]
  %s1 = inlined_call_operand.<no memory space> [shape: f32[1], index: 1, kind: input, shape index: {}]
  %s2 = inlined_call_operand.hbm [shape: f32[8,1024], index: 2, kind: input, shape index: {}]
  %s3 = inlined_call_operand.hbm [shape: f32[8,1024], index: 3, kind: output, shape index: {}]
  %s4 = sld [smem:[#allocation0]]
  $region18: #{tpu_custom_call.1} parent=0
    _
  %s6 = ssub.s32 1, %s4
  %s7 = scalar_select 0, %s6, %s4
  %8 = sst [smem:[#allocation3]] %s0
  %9 = sst [smem:[#allocation4]] %s1
  $region1: #{tpu_custom_call.1} parent=0
    #allocation5 [shape = 'u8[32768]{0}', space=vmem, size = 0x8000, scoped, tag = 'input window, operand 2, single buffered']
    #allocation6 [shape = 's32[1]{0}', space=sflag, size = 0x4, scoped, tag = 'scoped memory for tpu_custom_call.1']
    #allocation7 [shape = 's32[1]{0}', space=sflag, size = 0x4, scoped, tag = 'scoped memory for tpu_custom_call.1']
    #allocation8 [shape = 'u8[32768]{0}', space=vmem, size = 0x8000, scoped, tag = 'output window, operand 0, single buffered']
    %10 = vsyncpa [#allocation6], 0
    %11 = vsyncpa [#allocation7], 0
    // Predicated region
    $region2: #{tpu_custom_call.1} parent=1 // pred_check
      _
    $region3: #{tpu_custom_call.1} parent=1 // pred_check_branch
      %13 = sbr.rel (0) target = $region5
    $region4: #{tpu_custom_call.1} parent=1 // pred_region
      %15 = vsyncadd [#allocation6], 0
      %s17 = sshll.u32 %s2, 4
      %s18 = int_to_ptr.hbm [resolvable:$true] %s17
      %s19 = sshll.u32 [#allocation5], 4
      %s20 = int_to_ptr.vmem [resolvable:$true] %s19
      %22 = dma.hbm_to_vmem [thread:$0]  %s18, 1024, %s20, [#allocation6]
    $region5: #{tpu_custom_call.1} parent=1 // pred_fallthru
      _
    // Predicated region
    $region6: #{tpu_custom_call.1} parent=1 // pred_check
      _
    $region7: #{tpu_custom_call.1} parent=1 // pred_check_branch
      %24 = sbr.rel (0) target = $region9
    $region8: #{tpu_custom_call.1} parent=1 // pred_region
      %26 = dma.done [#allocation6], 1024
    $region9: #{tpu_custom_call.1} parent=1 // pred_fallthru
      _
    %s27 = sld [smem:[#allocation3]]
    %s28 = sld [smem:[#allocation4]]
    %v29 = vld [vmem:[#allocation5] sm:$0xff]
    %v30 = vld [vmem:[#allocation5 + $0x8] sm:$0xff]
    %v31 = vld [vmem:[#allocation5 + $0x10] sm:$0xff]
    %v32 = vld [vmem:[#allocation5 + $0x18] sm:$0xff]
    %v33 = vld [vmem:[#allocation5 + $0x20] sm:$0xff]
    %v34 = vld [vmem:[#allocation5 + $0x28] sm:$0xff]
    %v35 = vld [vmem:[#allocation5 + $0x30] sm:$0xff]
    %v36 = vld [vmem:[#allocation5 + $0x38] sm:$0xff]
    %v37 = vstv %s27
    %v38 = vmul.f32 %v29, %v37
    %v39 = vmul.f32 %v30, %v37
    %v40 = vmul.f32 %v31, %v37
    %v41 = vmul.f32 %v32, %v37
    %v42 = vmul.f32 %v33, %v37
    %v43 = vmul.f32 %v34, %v37
    %v44 = vmul.f32 %v35, %v37
    %v45 = vmul.f32 %v36, %v37
    %v46 = vstv %s28
    %v47 = vadd.f32 %v38, %v46
    %v48 = vadd.f32 %v39, %v46
    %v49 = vadd.f32 %v40, %v46
    %v50 = vadd.f32 %v41, %v46
    %v51 = vadd.f32 %v42, %v46
    %v52 = vadd.f32 %v43, %v46
    %v53 = vadd.f32 %v44, %v46
    %v54 = vadd.f32 %v45, %v46
    %55 = vst [vmem:[#allocation8] sm:$0xff] %v47
    %56 = vst [vmem:[#allocation8 + $0x8] sm:$0xff] %v48
    %57 = vst [vmem:[#allocation8 + $0x10] sm:$0xff] %v49
    %58 = vst [vmem:[#allocation8 + $0x18] sm:$0xff] %v50
    %59 = vst [vmem:[#allocation8 + $0x20] sm:$0xff] %v51
    %60 = vst [vmem:[#allocation8 + $0x28] sm:$0xff] %v52
    %61 = vst [vmem:[#allocation8 + $0x30] sm:$0xff] %v53
    %62 = vst [vmem:[#allocation8 + $0x38] sm:$0xff] %v54
    // Predicated region
    $region10: #{tpu_custom_call.1} parent=1 // pred_check
      _
    $region11: #{tpu_custom_call.1} parent=1 // pred_check_branch
      %64 = sbr.rel (0) target = $region13
    $region12: #{tpu_custom_call.1} parent=1 // pred_region
      %66 = vsyncadd [#allocation7], 0
      %s68 = sshll.u32 [#allocation8], 4
      %s69 = int_to_ptr.vmem [resolvable:$true] %s68
      %s70 = sshll.u32 %s3, 4
      %s71 = int_to_ptr.hbm [resolvable:$true] %s70
      %73 = dma.vmem_to_hbm [thread:$0]  %s69, 1024, %s71, [#allocation7]
    $region13: #{tpu_custom_call.1} parent=1 // pred_fallthru
      _
    // Predicated region
    $region14: #{tpu_custom_call.1} parent=1 // pred_check
      _
    $region15: #{tpu_custom_call.1} parent=1 // pred_check_branch
      %75 = sbr.rel (0) target = $region17
    $region16: #{tpu_custom_call.1} parent=1 // pred_region
      %77 = dma.done [#allocation7], 1024
    $region17: #{tpu_custom_call.1} parent=1 // pred_fallthru
      _
    %78 = vsyncpa [#allocation6], 1
    %79 = vsyncpa [#allocation7], 1

</llo_original>
